<compile_context>
chip_gen: v7x
topology: tpu7x:2x2x1
jax: 0.10.0
libtpu: 0.0.40
codegen_flags: <defaults>
</compile_context>

<pallas_src>
import functools

import jax
import jax.numpy as jnp
from jax.experimental import pallas as pl
from jax.experimental.pallas import tpu as pltpu


def _conv2d_tanh_kernel(x_ref, w_ref, b_ref, o_ref, col_ref, *,
                        kH, kW, sh, sw, Wp, OH, OW):
    """One batch-block per grid step.

    x_ref:   (NB, C, Hp*Wp)        padded input, spatial dims flattened, VMEM
    w_ref:   (O, kH*kW*C)          weights, tap-major rows, VMEM
    b_ref:   (O, 1)                bias (lane-broadcast), VMEM
    o_ref:   (NB, O, OH*OW)        output (lane-dense spatial axis), VMEM
    col_ref: (kH*kW*C, L) scratch  im2col slab, L = (OH-1)*sh*Wp + (OW-1)*sw + 1
    """
    NB, C, _ = x_ref.shape
    O, _ = w_ref.shape
    L = col_ref.shape[1]

    bias = b_ref[...]                                   # (O, 1)

    for nb in range(NB):                                # NB is static & small
        x = x_ref[nb]                                   # (C, Hp*Wp)

        # Build the im2col slab: each tap is a contiguous lane slice of the
        # flattened padded input (no strided/minor-dim gathers, no reshapes).
        for kh in range(kH):
            for kw in range(kW):
                tap = kh * kW + kw
                off = kh * Wp + kw
                col_ref[tap * C:(tap + 1) * C, :] = x[:, off:off + L]

        # Single fused MXU matmul with f32 accumulation: (O, K) x (K, L).
        acc = jnp.dot(w_ref[...], col_ref[...],
                      preferred_element_type=jnp.float32)   # (O, L)

        # Lane-dense epilogue: one lane-broadcast bias add + tanh on ~3 vregs.
        out_flat = jnp.tanh(acc + bias).astype(o_ref.dtype)  # (O, L)

        # Extract the valid output columns: for output row oh, the valid flat
        # indices are oh*sh*Wp + ow*sw, ow in [0, OW).
        for oh in range(OH):
            start = oh * sh * Wp
            if sw == 1:
                row = out_flat[:, start:start + OW]           # (O, OW)
            else:
                row = jax.lax.slice(out_flat, (0, start),
                                    (O, start + (OW - 1) * sw + 1), (1, sw))
            o_ref[nb, :, oh * OW:(oh + 1) * OW] = row


def conv2d_tanh(x_nchw, w_oihw, bias, stride=(1, 1), padding=(0, 0)):
    """Equivalent of Conv2dTanh3.forward: tanh(conv2d(x)).  NCHW in / NCHW out."""
    N, C, H, W = x_nchw.shape
    O, C_w, kH, kW = w_oihw.shape
    assert C == C_w
    sh, sw = stride
    ph, pw = padding
    Hp, Wp = H + 2 * ph, W + 2 * pw
    OH = (Hp - kH) // sh + 1
    OW = (Wp - kW) // sw + 1
    OHW = OH * OW
    K = kH * kW * C
    # Length of the flat "over-computed" column range; max read offset stays
    # inside Hp*Wp by construction of OH/OW.
    L = (OH - 1) * sh * Wp + (OW - 1) * sw + 1

    # Wrapper glue (no activation-tensor transposes): pad + flatten spatial.
    x = jnp.pad(x_nchw, ((0, 0), (0, 0), (ph, ph), (pw, pw)))
    x = x.reshape(N, C, Hp * Wp)
    # Tiny weight rearrangement (O x kH*kW*C floats) matching the tap-major
    # im2col row order: row index = (kh*kW + kw)*C + c.
    w2 = jnp.transpose(w_oihw, (0, 2, 3, 1)).reshape(O, K)
    b2 = bias.reshape(O, 1)

    # Batch blocking: fold batch into the block, but keep the grid at >= 2
    # "parallel" steps when N >= 2 so both TensorCores get work on v7x.
    NB = max(1, N // 2) if N >= 2 else 1
    grid_n = pl.cdiv(N, NB)

    kernel = functools.partial(_conv2d_tanh_kernel, kH=kH, kW=kW, sh=sh, sw=sw,
                               Wp=Wp, OH=OH, OW=OW)

    out = pl.pallas_call(
        kernel,
        out_shape=jax.ShapeDtypeStruct((N, O, OHW), x_nchw.dtype),
        grid_spec=pltpu.PrefetchScalarGridSpec(
            num_scalar_prefetch=0,
            grid=(grid_n,),
            in_specs=[
                pl.BlockSpec((NB, C, Hp * Wp), lambda n: (n, 0, 0)),
                pl.BlockSpec((O, K), lambda n: (0, 0)),
                pl.BlockSpec((O, 1), lambda n: (0, 0)),
            ],
            out_specs=pl.BlockSpec((NB, O, OHW), lambda n: (n, 0, 0)),
            scratch_shapes=[pltpu.VMEM((K, L), x_nchw.dtype)],
        ),
        compiler_params=pltpu.CompilerParams(
            dimension_semantics=("parallel",)),
    )(x, w2, b2)

    # Free row-major reshape back to NCHW.
    return out.reshape(N, O, OH, OW)


if __name__ == "__main__":
    # Module config (small, consistent with the forward's [N,C,H,W] contract).
    in_channels, out_channels = 4, 8
    kernel_size = (3, 3)
    stride = (1, 1)
    padding = (1, 1)

    key = jax.random.PRNGKey(0)
    kx, kwt, kb = jax.random.split(key, 3)

    x = jax.random.normal(kx, (2, in_channels, 16, 16), dtype=jnp.float32)
    # Deterministic synthetic parameters (shapes match nn.Conv2d's).
    fan_in = in_channels * kernel_size[0] * kernel_size[1]
    bound = 1.0 / (fan_in ** 0.5)
    w = jax.random.uniform(
        kwt, (out_channels, in_channels, *kernel_size),
        dtype=jnp.float32, minval=-bound, maxval=bound)
    b = jax.random.uniform(
        kb, (out_channels,), dtype=jnp.float32, minval=-bound, maxval=bound)

    out = conv2d_tanh(x, w, b, stride=stride, padding=padding)
    out = jax.block_until_ready(out)

    # Sanity check against XLA's conv (not part of the kernel path).
    ref = jnp.tanh(
        jax.lax.conv_general_dilated(
            x, w, window_strides=stride,
            padding=[(padding[0], padding[0]), (padding[1], padding[1])],
            dimension_numbers=("NCHW", "OIHW", "NCHW"))
        + b[None, :, None, None])
    assert out.shape == ref.shape
    assert jnp.max(jnp.abs(out - ref)) < 3e-5

    print("KERNEL_OK")
</pallas_src>

<mosaic_0001>
module attributes {stable_mosaic.version = 11 : i64} {
  func.func @_conv2d_tanh_kernel(%arg0: i32, %arg1: memref<1x4x324xf32, #tpu.memory_space<vmem>>, %arg2: memref<8x36xf32, #tpu.memory_space<vmem>>, %arg3: memref<8x1xf32, #tpu.memory_space<vmem>>, %arg4: memref<1x8x256xf32, #tpu.memory_space<vmem>>, %arg5: memref<36x286xf32, #tpu.memory_space<vmem>>) attributes {dimension_semantics = [#tpu.dimension_semantics<parallel>], iteration_bounds = array<i64: 2>, scalar_prefetch = 0 : i64, scratch_operands = 1 : i64, tpu.core_type = #tpu.core_type<tc>, window_params = [{transform_indices = @transform_0, window_bounds = array<i64: 1, 4, 324>}, {pipeline_mode = #tpu.pipeline_mode<synchronous>, transform_indices = @transform_1, window_bounds = array<i64: 8, 36>}, {pipeline_mode = #tpu.pipeline_mode<synchronous>, transform_indices = @transform_2, window_bounds = array<i64: 8, 1>}, {transform_indices = @transform_3, window_bounds = array<i64: 1, 8, 256>}]} {
    %c0 = arith.constant 0 : index
    %c0_0 = arith.constant 0 : index
    %0 = vector.load %arg3[%c0, %c0_0] : memref<8x1xf32, #tpu.memory_space<vmem>>, vector<8x1xf32>
    %c0_1 = arith.constant 0 : index
    %c0_2 = arith.constant 0 : index
    %c0_3 = arith.constant 0 : index
    %1 = vector.load %arg1[%c0_1, %c0_2, %c0_3] : memref<1x4x324xf32, #tpu.memory_space<vmem>>, vector<1x4x324xf32>
    %2 = vector.shape_cast %1 : vector<1x4x324xf32> to vector<4x324xf32>
    %3 = vector.extract_strided_slice %2 {offsets = [0, 0], sizes = [4, 286], strides = [1, 1]} : vector<4x324xf32> to vector<4x286xf32>
    %c0_4 = arith.constant 0 : index
    %c0_5 = arith.constant 0 : index
    %4 = vector.load %arg5[%c0_4, %c0_5] : memref<36x286xf32, #tpu.memory_space<vmem>>, vector<4x286xf32>
    tpu.vector_store %arg5[%c0_4, %c0_5], %3 {strides = array<i32>} : memref<36x286xf32, #tpu.memory_space<vmem>>, vector<4x286xf32>,
    %5 = vector.extract_strided_slice %2 {offsets = [0, 1], sizes = [4, 286], strides = [1, 1]} : vector<4x324xf32> to vector<4x286xf32>
    %c4 = arith.constant 4 : index
    %c0_6 = arith.constant 0 : index
    %6 = vector.load %arg5[%c4, %c0_6] : memref<36x286xf32, #tpu.memory_space<vmem>>, vector<4x286xf32>
    tpu.vector_store %arg5[%c4, %c0_6], %5 {strides = array<i32>} : memref<36x286xf32, #tpu.memory_space<vmem>>, vector<4x286xf32>,
    %7 = vector.extract_strided_slice %2 {offsets = [0, 2], sizes = [4, 286], strides = [1, 1]} : vector<4x324xf32> to vector<4x286xf32>
    %c8 = arith.constant 8 : index
    %c0_7 = arith.constant 0 : index
    %8 = vector.load %arg5[%c8, %c0_7] : memref<36x286xf32, #tpu.memory_space<vmem>>, vector<4x286xf32>
    tpu.vector_store %arg5[%c8, %c0_7], %7 {strides = array<i32>} : memref<36x286xf32, #tpu.memory_space<vmem>>, vector<4x286xf32>,
    %9 = vector.extract_strided_slice %2 {offsets = [0, 18], sizes = [4, 286], strides = [1, 1]} : vector<4x324xf32> to vector<4x286xf32>
    %c12 = arith.constant 12 : index
    %c0_8 = arith.constant 0 : index
    %10 = vector.load %arg5[%c12, %c0_8] : memref<36x286xf32, #tpu.memory_space<vmem>>, vector<4x286xf32>
    tpu.vector_store %arg5[%c12, %c0_8], %9 {strides = array<i32>} : memref<36x286xf32, #tpu.memory_space<vmem>>, vector<4x286xf32>,
    %11 = vector.extract_strided_slice %2 {offsets = [0, 19], sizes = [4, 286], strides = [1, 1]} : vector<4x324xf32> to vector<4x286xf32>
    %c16 = arith.constant 16 : index
    %c0_9 = arith.constant 0 : index
    %12 = vector.load %arg5[%c16, %c0_9] : memref<36x286xf32, #tpu.memory_space<vmem>>, vector<4x286xf32>
    tpu.vector_store %arg5[%c16, %c0_9], %11 {strides = array<i32>} : memref<36x286xf32, #tpu.memory_space<vmem>>, vector<4x286xf32>,
    %13 = vector.extract_strided_slice %2 {offsets = [0, 20], sizes = [4, 286], strides = [1, 1]} : vector<4x324xf32> to vector<4x286xf32>
    %c20 = arith.constant 20 : index
    %c0_10 = arith.constant 0 : index
    %14 = vector.load %arg5[%c20, %c0_10] : memref<36x286xf32, #tpu.memory_space<vmem>>, vector<4x286xf32>
    tpu.vector_store %arg5[%c20, %c0_10], %13 {strides = array<i32>} : memref<36x286xf32, #tpu.memory_space<vmem>>, vector<4x286xf32>,
    %15 = vector.extract_strided_slice %2 {offsets = [0, 36], sizes = [4, 286], strides = [1, 1]} : vector<4x324xf32> to vector<4x286xf32>
    %c24 = arith.constant 24 : index
    %c0_11 = arith.constant 0 : index
    %16 = vector.load %arg5[%c24, %c0_11] : memref<36x286xf32, #tpu.memory_space<vmem>>, vector<4x286xf32>
    tpu.vector_store %arg5[%c24, %c0_11], %15 {strides = array<i32>} : memref<36x286xf32, #tpu.memory_space<vmem>>, vector<4x286xf32>,
    %17 = vector.extract_strided_slice %2 {offsets = [0, 37], sizes = [4, 286], strides = [1, 1]} : vector<4x324xf32> to vector<4x286xf32>
    %c28 = arith.constant 28 : index
    %c0_12 = arith.constant 0 : index
    %18 = vector.load %arg5[%c28, %c0_12] : memref<36x286xf32, #tpu.memory_space<vmem>>, vector<4x286xf32>
    tpu.vector_store %arg5[%c28, %c0_12], %17 {strides = array<i32>} : memref<36x286xf32, #tpu.memory_space<vmem>>, vector<4x286xf32>,
    %19 = vector.extract_strided_slice %2 {offsets = [0, 38], sizes = [4, 286], strides = [1, 1]} : vector<4x324xf32> to vector<4x286xf32>
    %c32 = arith.constant 32 : index
    %c0_13 = arith.constant 0 : index
    %20 = vector.load %arg5[%c32, %c0_13] : memref<36x286xf32, #tpu.memory_space<vmem>>, vector<4x286xf32>
    tpu.vector_store %arg5[%c32, %c0_13], %19 {strides = array<i32>} : memref<36x286xf32, #tpu.memory_space<vmem>>, vector<4x286xf32>,
    %c0_14 = arith.constant 0 : index
    %c0_15 = arith.constant 0 : index
    %21 = vector.load %arg2[%c0_14, %c0_15] : memref<8x36xf32, #tpu.memory_space<vmem>>, vector<8x36xf32>
    %c0_16 = arith.constant 0 : index
    %c0_17 = arith.constant 0 : index
    %22 = vector.load %arg5[%c0_16, %c0_17] : memref<36x286xf32, #tpu.memory_space<vmem>>, vector<36x286xf32>
    %cst = arith.constant dense<0.000000e+00> : vector<8x286xf32>
    %23 = tpu.matmul %21, %22, %cst {dimension_numbers = #tpu.dot_dimension_numbers<[1], [0], [0], [1], [0, 0, 1, 1], [], []>} : vector<8x36xf32>, vector<36x286xf32>, vector<8x286xf32> -> vector<8x286xf32>
    %24 = vector.broadcast %0 : vector<8x1xf32> to vector<8x286xf32>
    %25 = arith.addf %23, %24 : vector<8x286xf32>
    %26 = math.tanh %25 : vector<8x286xf32>
    %27 = vector.extract_strided_slice %26 {offsets = [0, 0], sizes = [8, 16], strides = [1, 1]} : vector<8x286xf32> to vector<8x16xf32>
    %c0_18 = arith.constant 0 : index
    %c0_19 = arith.constant 0 : index
    %c0_20 = arith.constant 0 : index
    %28 = vector.load %arg4[%c0_18, %c0_19, %c0_20] : memref<1x8x256xf32, #tpu.memory_space<vmem>>, vector<1x8x16xf32>
    %29 = vector.shape_cast %28 : vector<1x8x16xf32> to vector<8x16xf32>
    %30 = vector.shape_cast %27 : vector<8x16xf32> to vector<1x8x16xf32>
    tpu.vector_store %arg4[%c0_18, %c0_19, %c0_20], %30 {strides = array<i32>} : memref<1x8x256xf32, #tpu.memory_space<vmem>>, vector<1x8x16xf32>,
    %31 = vector.extract_strided_slice %26 {offsets = [0, 18], sizes = [8, 16], strides = [1, 1]} : vector<8x286xf32> to vector<8x16xf32>
    %c0_21 = arith.constant 0 : index
    %c0_22 = arith.constant 0 : index
    %c16_23 = arith.constant 16 : index
    %32 = vector.load %arg4[%c0_21, %c0_22, %c16_23] : memref<1x8x256xf32, #tpu.memory_space<vmem>>, vector<1x8x16xf32>
    %33 = vector.shape_cast %32 : vector<1x8x16xf32> to vector<8x16xf32>
    %34 = vector.shape_cast %31 : vector<8x16xf32> to vector<1x8x16xf32>
    tpu.vector_store %arg4[%c0_21, %c0_22, %c16_23], %34 {strides = array<i32>} : memref<1x8x256xf32, #tpu.memory_space<vmem>>, vector<1x8x16xf32>,
    %35 = vector.extract_strided_slice %26 {offsets = [0, 36], sizes = [8, 16], strides = [1, 1]} : vector<8x286xf32> to vector<8x16xf32>
    %c0_24 = arith.constant 0 : index
    %c0_25 = arith.constant 0 : index
    %c32_26 = arith.constant 32 : index
    %36 = vector.load %arg4[%c0_24, %c0_25, %c32_26] : memref<1x8x256xf32, #tpu.memory_space<vmem>>, vector<1x8x16xf32>
    %37 = vector.shape_cast %36 : vector<1x8x16xf32> to vector<8x16xf32>
    %38 = vector.shape_cast %35 : vector<8x16xf32> to vector<1x8x16xf32>
    tpu.vector_store %arg4[%c0_24, %c0_25, %c32_26], %38 {strides = array<i32>} : memref<1x8x256xf32, #tpu.memory_space<vmem>>, vector<1x8x16xf32>,
    %39 = vector.extract_strided_slice %26 {offsets = [0, 54], sizes = [8, 16], strides = [1, 1]} : vector<8x286xf32> to vector<8x16xf32>
    %c0_27 = arith.constant 0 : index
    %c0_28 = arith.constant 0 : index
    %c48 = arith.constant 48 : index
    %40 = vector.load %arg4[%c0_27, %c0_28, %c48] : memref<1x8x256xf32, #tpu.memory_space<vmem>>, vector<1x8x16xf32>
    %41 = vector.shape_cast %40 : vector<1x8x16xf32> to vector<8x16xf32>
    %42 = vector.shape_cast %39 : vector<8x16xf32> to vector<1x8x16xf32>
    tpu.vector_store %arg4[%c0_27, %c0_28, %c48], %42 {strides = array<i32>} : memref<1x8x256xf32, #tpu.memory_space<vmem>>, vector<1x8x16xf32>,
    %43 = vector.extract_strided_slice %26 {offsets = [0, 72], sizes = [8, 16], strides = [1, 1]} : vector<8x286xf32> to vector<8x16xf32>
    %c0_29 = arith.constant 0 : index
    %c0_30 = arith.constant 0 : index
    %c64 = arith.constant 64 : index
    %44 = vector.load %arg4[%c0_29, %c0_30, %c64] : memref<1x8x256xf32, #tpu.memory_space<vmem>>, vector<1x8x16xf32>
    %45 = vector.shape_cast %44 : vector<1x8x16xf32> to vector<8x16xf32>
    %46 = vector.shape_cast %43 : vector<8x16xf32> to vector<1x8x16xf32>
    tpu.vector_store %arg4[%c0_29, %c0_30, %c64], %46 {strides = array<i32>} : memref<1x8x256xf32, #tpu.memory_space<vmem>>, vector<1x8x16xf32>,
    %47 = vector.extract_strided_slice %26 {offsets = [0, 90], sizes = [8, 16], strides = [1, 1]} : vector<8x286xf32> to vector<8x16xf32>
    %c0_31 = arith.constant 0 : index
    %c0_32 = arith.constant 0 : index
    %c80 = arith.constant 80 : index
    %48 = vector.load %arg4[%c0_31, %c0_32, %c80] : memref<1x8x256xf32, #tpu.memory_space<vmem>>, vector<1x8x16xf32>
    %49 = vector.shape_cast %48 : vector<1x8x16xf32> to vector<8x16xf32>
    %50 = vector.shape_cast %47 : vector<8x16xf32> to vector<1x8x16xf32>
    tpu.vector_store %arg4[%c0_31, %c0_32, %c80], %50 {strides = array<i32>} : memref<1x8x256xf32, #tpu.memory_space<vmem>>, vector<1x8x16xf32>,
    %51 = vector.extract_strided_slice %26 {offsets = [0, 108], sizes = [8, 16], strides = [1, 1]} : vector<8x286xf32> to vector<8x16xf32>
    %c0_33 = arith.constant 0 : index
    %c0_34 = arith.constant 0 : index
    %c96 = arith.constant 96 : index
    %52 = vector.load %arg4[%c0_33, %c0_34, %c96] : memref<1x8x256xf32, #tpu.memory_space<vmem>>, vector<1x8x16xf32>
    %53 = vector.shape_cast %52 : vector<1x8x16xf32> to vector<8x16xf32>
    %54 = vector.shape_cast %51 : vector<8x16xf32> to vector<1x8x16xf32>
    tpu.vector_store %arg4[%c0_33, %c0_34, %c96], %54 {strides = array<i32>} : memref<1x8x256xf32, #tpu.memory_space<vmem>>, vector<1x8x16xf32>,
    %55 = vector.extract_strided_slice %26 {offsets = [0, 126], sizes = [8, 16], strides = [1, 1]} : vector<8x286xf32> to vector<8x16xf32>
    %c0_35 = arith.constant 0 : index
    %c0_36 = arith.constant 0 : index
    %c112 = arith.constant 112 : index
    %56 = vector.load %arg4[%c0_35, %c0_36, %c112] : memref<1x8x256xf32, #tpu.memory_space<vmem>>, vector<1x8x16xf32>
    %57 = vector.shape_cast %56 : vector<1x8x16xf32> to vector<8x16xf32>
    %58 = vector.shape_cast %55 : vector<8x16xf32> to vector<1x8x16xf32>
    tpu.vector_store %arg4[%c0_35, %c0_36, %c112], %58 {strides = array<i32>} : memref<1x8x256xf32, #tpu.memory_space<vmem>>, vector<1x8x16xf32>,
    %59 = vector.extract_strided_slice %26 {offsets = [0, 144], sizes = [8, 16], strides = [1, 1]} : vector<8x286xf32> to vector<8x16xf32>
    %c0_37 = arith.constant 0 : index
    %c0_38 = arith.constant 0 : index
    %c128 = arith.constant 128 : index
    %60 = vector.load %arg4[%c0_37, %c0_38, %c128] : memref<1x8x256xf32, #tpu.memory_space<vmem>>, vector<1x8x16xf32>
    %61 = vector.shape_cast %60 : vector<1x8x16xf32> to vector<8x16xf32>
    %62 = vector.shape_cast %59 : vector<8x16xf32> to vector<1x8x16xf32>
    tpu.vector_store %arg4[%c0_37, %c0_38, %c128], %62 {strides = array<i32>} : memref<1x8x256xf32, #tpu.memory_space<vmem>>, vector<1x8x16xf32>,
    %63 = vector.extract_strided_slice %26 {offsets = [0, 162], sizes = [8, 16], strides = [1, 1]} : vector<8x286xf32> to vector<8x16xf32>
    %c0_39 = arith.constant 0 : index
    %c0_40 = arith.constant 0 : index
    %c144 = arith.constant 144 : index
    %64 = vector.load %arg4[%c0_39, %c0_40, %c144] : memref<1x8x256xf32, #tpu.memory_space<vmem>>, vector<1x8x16xf32>
    %65 = vector.shape_cast %64 : vector<1x8x16xf32> to vector<8x16xf32>
    %66 = vector.shape_cast %63 : vector<8x16xf32> to vector<1x8x16xf32>
    tpu.vector_store %arg4[%c0_39, %c0_40, %c144], %66 {strides = array<i32>} : memref<1x8x256xf32, #tpu.memory_space<vmem>>, vector<1x8x16xf32>,
    %67 = vector.extract_strided_slice %26 {offsets = [0, 180], sizes = [8, 16], strides = [1, 1]} : vector<8x286xf32> to vector<8x16xf32>
    %c0_41 = arith.constant 0 : index
    %c0_42 = arith.constant 0 : index
    %c160 = arith.constant 160 : index
    %68 = vector.load %arg4[%c0_41, %c0_42, %c160] : memref<1x8x256xf32, #tpu.memory_space<vmem>>, vector<1x8x16xf32>
    %69 = vector.shape_cast %68 : vector<1x8x16xf32> to vector<8x16xf32>
    %70 = vector.shape_cast %67 : vector<8x16xf32> to vector<1x8x16xf32>
    tpu.vector_store %arg4[%c0_41, %c0_42, %c160], %70 {strides = array<i32>} : memref<1x8x256xf32, #tpu.memory_space<vmem>>, vector<1x8x16xf32>,
    %71 = vector.extract_strided_slice %26 {offsets = [0, 198], sizes = [8, 16], strides = [1, 1]} : vector<8x286xf32> to vector<8x16xf32>
    %c0_43 = arith.constant 0 : index
    %c0_44 = arith.constant 0 : index
    %c176 = arith.constant 176 : index
    %72 = vector.load %arg4[%c0_43, %c0_44, %c176] : memref<1x8x256xf32, #tpu.memory_space<vmem>>, vector<1x8x16xf32>
    %73 = vector.shape_cast %72 : vector<1x8x16xf32> to vector<8x16xf32>
    %74 = vector.shape_cast %71 : vector<8x16xf32> to vector<1x8x16xf32>
    tpu.vector_store %arg4[%c0_43, %c0_44, %c176], %74 {strides = array<i32>} : memref<1x8x256xf32, #tpu.memory_space<vmem>>, vector<1x8x16xf32>,
    %75 = vector.extract_strided_slice %26 {offsets = [0, 216], sizes = [8, 16], strides = [1, 1]} : vector<8x286xf32> to vector<8x16xf32>
    %c0_45 = arith.constant 0 : index
    %c0_46 = arith.constant 0 : index
    %c192 = arith.constant 192 : index
    %76 = vector.load %arg4[%c0_45, %c0_46, %c192] : memref<1x8x256xf32, #tpu.memory_space<vmem>>, vector<1x8x16xf32>
    %77 = vector.shape_cast %76 : vector<1x8x16xf32> to vector<8x16xf32>
    %78 = vector.shape_cast %75 : vector<8x16xf32> to vector<1x8x16xf32>
    tpu.vector_store %arg4[%c0_45, %c0_46, %c192], %78 {strides = array<i32>} : memref<1x8x256xf32, #tpu.memory_space<vmem>>, vector<1x8x16xf32>,
    %79 = vector.extract_strided_slice %26 {offsets = [0, 234], sizes = [8, 16], strides = [1, 1]} : vector<8x286xf32> to vector<8x16xf32>
    %c0_47 = arith.constant 0 : index
    %c0_48 = arith.constant 0 : index
    %c208 = arith.constant 208 : index
    %80 = vector.load %arg4[%c0_47, %c0_48, %c208] : memref<1x8x256xf32, #tpu.memory_space<vmem>>, vector<1x8x16xf32>
    %81 = vector.shape_cast %80 : vector<1x8x16xf32> to vector<8x16xf32>
    %82 = vector.shape_cast %79 : vector<8x16xf32> to vector<1x8x16xf32>
    tpu.vector_store %arg4[%c0_47, %c0_48, %c208], %82 {strides = array<i32>} : memref<1x8x256xf32, #tpu.memory_space<vmem>>, vector<1x8x16xf32>,
    %83 = vector.extract_strided_slice %26 {offsets = [0, 252], sizes = [8, 16], strides = [1, 1]} : vector<8x286xf32> to vector<8x16xf32>
    %c0_49 = arith.constant 0 : index
    %c0_50 = arith.constant 0 : index
    %c224 = arith.constant 224 : index
    %84 = vector.load %arg4[%c0_49, %c0_50, %c224] : memref<1x8x256xf32, #tpu.memory_space<vmem>>, vector<1x8x16xf32>
    %85 = vector.shape_cast %84 : vector<1x8x16xf32> to vector<8x16xf32>
    %86 = vector.shape_cast %83 : vector<8x16xf32> to vector<1x8x16xf32>
    tpu.vector_store %arg4[%c0_49, %c0_50, %c224], %86 {strides = array<i32>} : memref<1x8x256xf32, #tpu.memory_space<vmem>>, vector<1x8x16xf32>,
    %87 = vector.extract_strided_slice %26 {offsets = [0, 270], sizes = [8, 16], strides = [1, 1]} : vector<8x286xf32> to vector<8x16xf32>
    %c0_51 = arith.constant 0 : index
    %c0_52 = arith.constant 0 : index
    %c240 = arith.constant 240 : index
    %88 = vector.load %arg4[%c0_51, %c0_52, %c240] : memref<1x8x256xf32, #tpu.memory_space<vmem>>, vector<1x8x16xf32>
    %89 = vector.shape_cast %88 : vector<1x8x16xf32> to vector<8x16xf32>
    %90 = vector.shape_cast %87 : vector<8x16xf32> to vector<1x8x16xf32>
    tpu.vector_store %arg4[%c0_51, %c0_52, %c240], %90 {strides = array<i32>} : memref<1x8x256xf32, #tpu.memory_space<vmem>>, vector<1x8x16xf32>,
    return
  }
  func.func @transform_0(%arg0: i32) -> (i32, i32, i32) {
    %c0_i32 = arith.constant 0 : i32
    %c0_i32_0 = arith.constant 0 : i32
    %c0_i32_1 = arith.constant 0 : i32
    return %arg0, %c0_i32, %c0_i32_0 : i32, i32, i32
  }
  func.func @transform_1(%arg0: i32) -> (i32, i32) {
    %c0_i32 = arith.constant 0 : i32
    %c0_i32_0 = arith.constant 0 : i32
    %c0_i32_1 = arith.constant 0 : i32
    return %c0_i32, %c0_i32_0 : i32, i32
  }
  func.func @transform_2(%arg0: i32) -> (i32, i32) {
    %c0_i32 = arith.constant 0 : i32
    %c0_i32_0 = arith.constant 0 : i32
    %c0_i32_1 = arith.constant 0 : i32
    return %c0_i32, %c0_i32_0 : i32, i32
  }
  func.func @transform_3(%arg0: i32) -> (i32, i32, i32) {
    %c0_i32 = arith.constant 0 : i32
    %c0_i32_0 = arith.constant 0 : i32
    %c0_i32_1 = arith.constant 0 : i32
    return %arg0, %c0_i32, %c0_i32_0 : i32, i32, i32
  }
}

</mosaic_0001>

<llo_original>
// kernel: tpu_custom_call.1
$region0: #{tpu_custom_call.1}
  #allocation0 [shape = 'u32[]', space=smem, size = 0x4, offset = 0x4, fixed_abs, tag = 'smem constant byte address 0x4 - core index']
  #allocation1 [shape = 'u32[144,128]{1,0:T(1,128)}', space=vmem, size = 0x12000, scoped, tag = 'internal scratch']
  #allocation2 [shape = 'f32[36,286]{1,0:T(8,128)}', space=vmem, size = 0xf000, scoped, tag = 'scratch operand']
  %s0 = inlined_call_operand.hbm [shape: f32[2,4,324], index: 0, kind: input, shape index: {}]
  %s1 = inlined_call_operand.vmem [shape: f32[8,36], index: 1, kind: input, shape index: {}]
  %s2 = inlined_call_operand.vmem [shape: f32[8,1], index: 2, kind: input, shape index: {}]
  %s3 = inlined_call_operand.hbm [shape: f32[2,8,256], index: 3, kind: output, shape index: {}]
  %s4 = sld [smem:[#allocation0]]
  $region49: #{tpu_custom_call.1} parent=0
    _
  %s6 = ssub.s32 1, %s4
  %s7 = scalar_select 0, %s6, %s4
  $region1: #{tpu_custom_call.1} parent=0
    #allocation3 [shape = 'u8[12288]{0}', space=vmem, size = 0x3000, scoped, tag = 'input window, operand 0']
    #allocation4 [shape = 's32[2]{0}', space=sflag, size = 0x8, scoped, tag = 'scoped memory for tpu_custom_call.1']
    #allocation5 [shape = 's32[2]{0}', space=sflag, size = 0x8, scoped, tag = 'scoped memory for tpu_custom_call.1']
    #allocation6 [shape = 'u8[16384]{0}', space=vmem, size = 0x4000, scoped, tag = 'output window, operand 0']
    %8 = vsyncpa [#allocation4], 0
    %s9 = scalar_lea.sflag [#allocation4], 1
    %10 = vsyncpa %s9, 0
    %11 = vsyncpa [#allocation5], 0
    %s12 = scalar_lea.sflag [#allocation5], 1
    %13 = vsyncpa %s12, 0
    loop: start=0, step=1, limit=4
    $region2: #{tpu_custom_call.1} parent=1 // loop_pre_header
      _
    $region3: #{tpu_custom_call.1} parent=1 // loop_header
      %s15 = sphi 0, %s19
      %p16 = scmp.ge.s32.totalorder %s15, 4
      %s25 = sphi 0, %s27
      %s28 = sphi 0, %s25
      %s29 = sphi 0, %s28
      %s45 = sphi 0, %s29
      %s49 = sphi 0, %s49
      %s51 = sphi 0, %s49
      %s52 = sphi 0, %s51
      %s66 = sphi 0, %s52
      %s70 = sphi 0, %s70
      %s72 = sphi 0, %s70
      %s73 = sphi 0, %s72
      %s87 = sphi 0, %s73
      %s93 = sphi 0, %s95
      %s96 = sphi 0, %s93
      %s97 = sphi 0, %s96
      %s113 = sphi 0, %s97
    $region4: #{tpu_custom_call.1} parent=1 // loop_header_branch
      %18 = sbr.rel (%p16) target = $region8
    $region5: #{tpu_custom_call.1} parent=1 // loop_body
      %s20 = ssub.s32 %s15, 1
      %s21 = ssub.s32 %s15, 2
      %s22 = sadd.s32 %s15, 1
      %s23 = ssub.s32 %s15, %s22
      %p24 = scmp.eq.s32.totalorder %s23, 0
      %s26 = sadd.s32 %s25, 1
      %s27 = scalar_select %p24, %s25, %s26
      %p30 = pneg %p24
      %p31 = scmp.eq.s32.totalorder %s15, 1
      %p32 = por %p30, %p31
      %p33 = scmp.ne.s32.totalorder %s25, %s28
      %p34 = scmp.eq.s32.totalorder %s15, 0
      %p35 = por %p33, %p34
      %p36 = scmp.ne.s32.totalorder %s25, %s28
      %p37 = scmp.eq.s32.totalorder %s20, 1
      %p38 = por %p36, %p37
      %p39 = scmp.ne.s32.totalorder %s28, %s29
      %p40 = scmp.eq.s32.totalorder %s20, 0
      %p41 = por %p39, %p40
      %p42 = scmp.ne.s32.totalorder %s28, %s29
      %p43 = scmp.eq.s32.totalorder %s21, 1
      %p44 = por %p42, %p43
      %p46 = scmp.ne.s32.totalorder %s29, %s45
      %p47 = scmp.eq.s32.totalorder %s21, 0
      %p48 = por %p46, %p47
      %s50 = sadd.s32 %s49, 1
      %p53 = scmp.eq.s32.totalorder %s15, 1
      %p54 = scmp.ne.s32.totalorder %s49, %s51
      %p55 = scmp.eq.s32.totalorder %s15, 0
      %p56 = por %p54, %p55
      %p57 = scmp.ne.s32.totalorder %s49, %s51
      %p58 = scmp.eq.s32.totalorder %s20, 1
      %p59 = por %p57, %p58
      %p60 = scmp.ne.s32.totalorder %s51, %s52
      %p61 = scmp.eq.s32.totalorder %s20, 0
      %p62 = por %p60, %p61
      %p63 = scmp.ne.s32.totalorder %s51, %s52
      %p64 = scmp.eq.s32.totalorder %s21, 1
      %p65 = por %p63, %p64
      %p67 = scmp.ne.s32.totalorder %s52, %s66
      %p68 = scmp.eq.s32.totalorder %s21, 0
      %p69 = por %p67, %p68
      %s71 = sadd.s32 %s70, 1
      %p74 = scmp.eq.s32.totalorder %s15, 1
      %p75 = scmp.ne.s32.totalorder %s70, %s72
      %p76 = scmp.eq.s32.totalorder %s15, 0
      %p77 = por %p75, %p76
      %p78 = scmp.ne.s32.totalorder %s70, %s72
      %p79 = scmp.eq.s32.totalorder %s20, 1
      %p80 = por %p78, %p79
      %p81 = scmp.ne.s32.totalorder %s72, %s73
      %p82 = scmp.eq.s32.totalorder %s20, 0
      %p83 = por %p81, %p82
      %p84 = scmp.ne.s32.totalorder %s72, %s73
      %p85 = scmp.eq.s32.totalorder %s21, 1
      %p86 = por %p84, %p85
      %p88 = scmp.ne.s32.totalorder %s73, %s87
      %p89 = scmp.eq.s32.totalorder %s21, 0
      %p90 = por %p88, %p89
      %s91 = ssub.s32 %s15, %s22
      %p92 = scmp.eq.s32.totalorder %s91, 0
      %s94 = sadd.s32 %s93, 1
      %s95 = scalar_select %p92, %s93, %s94
      %p98 = pneg %p92
      %p99 = scmp.eq.s32.totalorder %s15, 1
      %p100 = por %p98, %p99
      %p101 = scmp.ne.s32.totalorder %s93, %s96
      %p102 = scmp.eq.s32.totalorder %s15, 0
      %p103 = por %p101, %p102
      %p104 = scmp.ne.s32.totalorder %s93, %s96
      %p105 = scmp.eq.s32.totalorder %s20, 1
      %p106 = por %p104, %p105
      %p107 = scmp.ne.s32.totalorder %s96, %s97
      %p108 = scmp.eq.s32.totalorder %s20, 0
      %p109 = por %p107, %p108
      %p110 = scmp.ne.s32.totalorder %s96, %s97
      %p111 = scmp.eq.s32.totalorder %s21, 1
      %p112 = por %p110, %p111
      %p114 = scmp.ne.s32.totalorder %s97, %s113
      %p115 = scmp.eq.s32.totalorder %s21, 0
      %p116 = por %p114, %p115
      %p117 = scmp.le.s32.totalorder 1, %s15
      %p118 = scmp.lt.s32.totalorder %s15, 3
      %p119 = pnand %p117, %p118
      %p120 = pneg %p119
      // Predicated region
      $region9: #{tpu_custom_call.1} parent=5 // pred_check
        _
      $region10: #{tpu_custom_call.1} parent=5 // pred_check_branch
        %122 = sbr.rel (%p119) target = $region12
      $region11: #{tpu_custom_call.1} parent=5 // pred_region
        %s123 = ssub.s32 %s15, 1
        // Predicated region
        $region13: #{tpu_custom_call.1} parent=11 // pred_check
          %p124 = pneg %p62
        $region14: #{tpu_custom_call.1} parent=11 // pred_check_branch
          %126 = sbr.rel (%p124) target = $region16
        $region15: #{tpu_custom_call.1} parent=11 // pred_region
          _
        $region16: #{tpu_custom_call.1} parent=11 // pred_fallthru
          _
        // Predicated region
        $region17: #{tpu_custom_call.1} parent=11 // pred_check
          %p127 = pneg %p83
        $region18: #{tpu_custom_call.1} parent=11 // pred_check_branch
          %129 = sbr.rel (%p127) target = $region20
        $region19: #{tpu_custom_call.1} parent=11 // pred_region
          _
        $region20: #{tpu_custom_call.1} parent=11 // pred_fallthru
          _
      $region12: #{tpu_custom_call.1} parent=5 // pred_fallthru
        _
      %p130 = scmp.lt.s32.totalorder %s15, 2
      // Predicated region
      $region21: #{tpu_custom_call.1} parent=5 // pred_check
        %p131 = pneg %p130
      $region22: #{tpu_custom_call.1} parent=5 // pred_check_branch
        %133 = sbr.rel (%p131) target = $region24
      $region23: #{tpu_custom_call.1} parent=5 // pred_region
        // Predicated region
        $region25: #{tpu_custom_call.1} parent=23 // pred_check
          %p134 = pneg %p35
        $region26: #{tpu_custom_call.1} parent=23 // pred_check_branch
          %136 = sbr.rel (%p134) target = $region28
        $region27: #{tpu_custom_call.1} parent=23 // pred_region
          %s137 = sand.u32 %s25, 1
          %s138 = scalar_lea.sflag [#allocation4], %s137
          %s139 = sand.u32 %s25, 1
          %s140 = smul.addr %s139, 12
          %s141 = scalar_lea.vmem [#allocation3], %s140
          %s143 = ssub.s32 192, 192
          %144 = vsyncadd %s138, %s143
          %s145 = smul.addr %s15, 3
          %s146 = smul.addr %s145, 64
          %s147 = scalar_lea.hbm %s0, %s146
          %s149 = sshll.u32 %s141, 4
          %s150 = int_to_ptr.vmem [resolvable:$true] %s149
          %152 = dma.hbm_to_vmem [thread:$0]  %s147, 192, %s150, %s138
        $region28: #{tpu_custom_call.1} parent=23 // pred_fallthru
          _
      $region24: #{tpu_custom_call.1} parent=5 // pred_fallthru
        _
      %p153 = scmp.le.s32.totalorder 1, %s15
      %p154 = scmp.lt.s32.totalorder %s15, 3
      %p155 = pnand %p153, %p154
      %p156 = pneg %p155
      // Predicated region
      $region29: #{tpu_custom_call.1} parent=5 // pred_check
        _
      $region30: #{tpu_custom_call.1} parent=5 // pred_check_branch
        %158 = sbr.rel (%p155) target = $region32
      $region31: #{tpu_custom_call.1} parent=5 // pred_region
        %s159 = ssub.s32 %s15, 1
        %s160 = sand.u32 %s28, 1
        %s161 = scalar_lea.sflag [#allocation4], %s160
        %s162 = sand.u32 %s28, 1
        %s163 = smul.addr %s162, 12
        %s164 = scalar_lea.vmem [#allocation3], %s163
        // Predicated region
        $region33: #{tpu_custom_call.1} parent=31 // pred_check
          %p165 = pneg %p41
        $region34: #{tpu_custom_call.1} parent=31 // pred_check_branch
          %167 = sbr.rel (%p165) target = $region36
        $region35: #{tpu_custom_call.1} parent=31 // pred_region
          %168 = dma.done %s161, 192
        $region36: #{tpu_custom_call.1} parent=31 // pred_fallthru
          _
        %s169 = sand.u32 %s28, 1
        %s170 = scalar_lea.sflag [#allocation4], %s169
        %s171 = sand.u32 %s28, 1
        %s172 = smul.addr %s171, 12
        %s173 = scalar_lea.vmem [#allocation3], %s172
        %p174 = pneg %p41
        %p175 = pneg %p38
        %p176 = pneg %p62
        %p177 = pneg %p59
        %p178 = pneg %p83
        %p179 = pneg %p80
        %p180 = pneg %p109
        %p181 = pneg %p106
        %s182 = sand.u32 %s96, 1
        %s183 = scalar_lea.sflag [#allocation5], %s182
        %s184 = sand.u32 %s96, 1
        %s185 = smul.addr %s184, 16
        %s186 = scalar_lea.vmem [#allocation6], %s185
        %v187 = vld [vmem:[%s2] sm:$0xff]
        %v188 = vld [vmem:[%s164] sm:$0xff]
        %v189 = vld [vmem:[%s164 + $0x8] sm:$0xf]
        %v192 = vcombine.high %v188, %v188
        %194 = vst [vmem:[#allocation2] sm:$0xf] %v188
        %195 = vst [vmem:[#allocation2 + $0x8] sm:$0xf] %v192
        %vm196 = vcmask 240640
        %197 = vst.msk [vmem:[#allocation2 + $0x10] sm:$0xf] %vm196, %v189
        %v198 = vcombine.low %v188, %v188
        %v199 = vcombine.low %v189, %v189
        %200 = vrot.lane.b32.xlu0 %v198, 127
        %v201 = vpop.permute.xlu0 %200
        %202 = vrot.lane.b32.xlu0 %v188, 127
        %v203 = vpop.permute.xlu0 %202
        %204 = vrot.lane.b32.xlu0 %v199, 127
        %v205 = vpop.permute.xlu0 %204
        %vm206 = vcmask 1039360
        %v207 = vsel %vm206, %v201, %v203
        %v208 = vsel %vm206, %v203, %v205
        %212 = vst [vmem:[#allocation2] sm:$0xf0] %v207
        %213 = vst [vmem:[#allocation2 + $0x8] sm:$0xf0] %v208
        %vm214 = vcmask 244740
        %215 = vst.msk [vmem:[#allocation2 + $0x10] sm:$0xf0] %vm214, %v205
        %216 = vrot.lane.b32.xlu0 %v188, 126
        %v217 = vpop.permute.xlu0 %216
        %218 = vrot.lane.b32.xlu0 %v192, 126
        %v219 = vpop.permute.xlu0 %218
        %220 = vrot.lane.b32.xlu0 %v189, 126
        %v221 = vpop.permute.xlu0 %220
        %vm222 = vcmask 1031168
        %v223 = vsel %vm222, %v217, %v219
        %v224 = vsel %vm222, %v219, %v221
        %228 = vst [vmem:[#allocation2 + $0x18] sm:$0xf] %v223
        %229 = vst [vmem:[#allocation2 + $0x20] sm:$0xf] %v224
        %230 = vst.msk [vmem:[#allocation2 + $0x28] sm:$0xf] %vm196, %v221
        %231 = vrot.lane.b32.xlu0 %v198, 110
        %v232 = vpop.permute.xlu0 %231
        %233 = vrot.lane.b32.xlu0 %v188, 110
        %v234 = vpop.permute.xlu0 %233
        %235 = vrot.lane.b32.xlu0 %v199, 110
        %v236 = vpop.permute.xlu0 %235
        %vm237 = vcmask 900096
        %v238 = vsel %vm237, %v232, %v234
        %v239 = vsel %vm237, %v234, %v236
        %243 = vst [vmem:[#allocation2 + $0x18] sm:$0xf0] %v238
        %244 = vst [vmem:[#allocation2 + $0x20] sm:$0xf0] %v239
        %245 = vst.msk [vmem:[#allocation2 + $0x28] sm:$0xf0] %vm214, %v236
        %246 = vrot.lane.b32.xlu0 %v188, 109
        %v247 = vpop.permute.xlu0 %246
        %248 = vrot.lane.b32.xlu0 %v192, 109
        %v249 = vpop.permute.xlu0 %248
        %250 = vrot.lane.b32.xlu0 %v189, 109
        %v251 = vpop.permute.xlu0 %250
        %vm252 = vcmask 891904
        %v253 = vsel %vm252, %v247, %v249
        %v254 = vsel %vm252, %v249, %v251
        %258 = vst [vmem:[#allocation2 + $0x30] sm:$0xf] %v253
        %259 = vst [vmem:[#allocation2 + $0x38] sm:$0xf] %v254
        %260 = vst.msk [vmem:[#allocation2 + $0x40] sm:$0xf] %vm196, %v251
        %261 = vrot.lane.b32.xlu0 %v198, 108
        %v262 = vpop.permute.xlu0 %261
        %263 = vrot.lane.b32.xlu0 %v188, 108
        %v264 = vpop.permute.xlu0 %263
        %265 = vrot.lane.b32.xlu0 %v199, 108
        %v266 = vpop.permute.xlu0 %265
        %vm267 = vcmask 883712
        %v268 = vsel %vm267, %v262, %v264
        %v269 = vsel %vm267, %v264, %v266
        %273 = vst [vmem:[#allocation2 + $0x30] sm:$0xf0] %v268
        %274 = vst [vmem:[#allocation2 + $0x38] sm:$0xf0] %v269
        %275 = vst.msk [vmem:[#allocation2 + $0x40] sm:$0xf0] %vm214, %v266
        %276 = vrot.lane.b32.xlu0 %v188, 92
        %v277 = vpop.permute.xlu0 %276
        %278 = vrot.lane.b32.xlu0 %v192, 92
        %v279 = vpop.permute.xlu0 %278
        %280 = vrot.lane.b32.xlu0 %v189, 92
        %v281 = vpop.permute.xlu0 %280
        %vm282 = vcmask 752640
        %v283 = vsel %vm282, %v277, %v279
        %v284 = vsel %vm282, %v279, %v281
        %288 = vst [vmem:[#allocation2 + $0x48] sm:$0xf] %v283
        %289 = vst [vmem:[#allocation2 + $0x50] sm:$0xf] %v284
        %290 = vst.msk [vmem:[#allocation2 + $0x58] sm:$0xf] %vm196, %v281
        %291 = vrot.lane.b32.xlu0 %v198, 91
        %v292 = vpop.permute.xlu0 %291
        %293 = vrot.lane.b32.xlu0 %v188, 91
        %v294 = vpop.permute.xlu0 %293
        %295 = vrot.lane.b32.xlu0 %v199, 91
        %v296 = vpop.permute.xlu0 %295
        %vm297 = vcmask 744448
        %v298 = vsel %vm297, %v292, %v294
        %v299 = vsel %vm297, %v294, %v296
        %303 = vst [vmem:[#allocation2 + $0x48] sm:$0xf0] %v298
        %304 = vst [vmem:[#allocation2 + $0x50] sm:$0xf0] %v299
        %305 = vst.msk [vmem:[#allocation2 + $0x58] sm:$0xf0] %vm214, %v296
        %306 = vrot.lane.b32.xlu0 %v188, 90
        %v307 = vpop.permute.xlu0 %306
        %308 = vrot.lane.b32.xlu0 %v192, 90
        %v309 = vpop.permute.xlu0 %308
        %310 = vrot.lane.b32.xlu0 %v189, 90
        %v311 = vpop.permute.xlu0 %310
        %vm312 = vcmask 736256
        %v313 = vsel %vm312, %v307, %v309
        %v314 = vsel %vm312, %v309, %v311
        %318 = vst [vmem:[#allocation2 + $0x60] sm:$0xf] %v313
        %319 = vst [vmem:[#allocation2 + $0x68] sm:$0xf] %v314
        %320 = vst.msk [vmem:[#allocation2 + $0x70] sm:$0xf] %vm196, %v311
        %v321 = vld [vmem:[%s1] sm:$0xff]
        %v322 = vld [vmem:[#allocation2] sm:$0xff]
        %v323 = vld [vmem:[#allocation2 + $0x8] sm:$0xff]
        %v324 = vld [vmem:[#allocation2 + $0x10] sm:$0xff]
        %v325 = vld [vmem:[#allocation2 + $0x18] sm:$0xff]
        %v326 = vld [vmem:[#allocation2 + $0x20] sm:$0xff]
        %v327 = vld [vmem:[#allocation2 + $0x28] sm:$0xff]
        %v328 = vld [vmem:[#allocation2 + $0x30] sm:$0xff]
        %v329 = vld [vmem:[#allocation2 + $0x38] sm:$0xff]
        %v330 = vld [vmem:[#allocation2 + $0x40] sm:$0xff]
        %v331 = vld [vmem:[#allocation2 + $0x48] sm:$0xff]
        %v332 = vld [vmem:[#allocation2 + $0x50] sm:$0xff]
        %v333 = vld [vmem:[#allocation2 + $0x58] sm:$0xff]
        %v334 = vld [vmem:[#allocation2 + $0x60] sm:$0xf]
        %v335 = vld [vmem:[#allocation2 + $0x68] sm:$0xf]
        %v336 = vld [vmem:[#allocation2 + $0x70] sm:$0xf]
        %338 = vset.pattern.permute.xlu0 0
        %339 = vperm.xlu0 %338, %v187
        %v340 = vpop.permute.xlu0 %339
        %vm342 = vcmask 293888
        %v344 = vsel %vm342, %v321, 0
        %vm346 = vcmask 1043456
        %v348 = vsel %vm346, %v334, 0
        %v351 = vsel %vm346, %v335, 0
        %v354 = vsel %vm346, %v336, 0
        %356 = vmatprep.subr.mxu0 %v323
        %357 = vmatpush1.msra.mxu0 %v322
        %358 = vmatprep.subr.mxu0 %v326
        %359 = vmatpush1.msra.mxu0 %v325
        %360 = vmatprep.subr.mxu0 %v329
        %361 = vmatpush1.msra.mxu0 %v328
        %362 = vmatprep.subr.mxu0 %v332
        %363 = vmatpush1.msra.mxu0 %v331
        %364 = vmatprep.subr.mxu0 %v351
        %365 = vmatpush1.msra.mxu0 %v348
        %366 = vmatprep.subr.mxu0 0.0
        %367 = vmatpush1.msra.mxu0 0.0
        %368 = vmatprep.subr.mxu0 0.0
        %369 = vmatpush1.msra.mxu0 0.0
        %370 = vmatprep.subr.mxu0 0.0
        %371 = vmatpush1.msra.mxu0 0.0
        %372 = vmatprep.subr.mxu0 0.0
        %373 = vmatpush1.msra.mxu0 0.0
        %374 = vmatprep.subr.mxu0 0.0
        %375 = vmatpush1.msra.mxu0 0.0
        %376 = vmatprep.subr.mxu0 0.0
        %377 = vmatpush1.msra.mxu0 0.0
        %378 = vmatprep.subr.mxu0 0.0
        %379 = vmatpush1.msra.mxu0 0.0
        %380 = vmatprep.subr.mxu0 0.0
        %381 = vmatpush1.msra.mxu0 0.0
        %382 = vmatprep.subr.mxu0 0.0
        %383 = vmatpush1.msra.mxu0 0.0
        %384 = vmatprep.subr.mxu0 0.0
        %385 = vmatpush1.msra.mxu0 0.0
        %386 = vmatprep.subr.mxu0 0.0
        %387 = vmatpush1.msra.mxu0 0.0
        %388 = vmatprep.subr.mxu0 0.0
        %389 = vmatpush1.msra.mxu0 0.0
        %390 = vmatprep.subr.mxu0 0.0
        %391 = vmatpush1.msra.mxu0 0.0
        %392 = vmatprep.subr.mxu0 0.0
        %393 = vmatpush1.msra.mxu0 0.0
        %394 = vmatprep.subr.mxu0 0.0
        %395 = vmatpush1.msra.mxu0 0.0
        %396 = vmatprep.subr.mxu0 0.0
        %397 = vmatpush1.msra.mxu0 0.0
        %398 = vmatprep.subr.mxu0 0.0
        %399 = vmatpush1.msra.mxu0 0.0
        %400 = vmatprep.subr.mxu0 0.0
        %401 = vmatpush1.msra.mxu0 0.0
        %402 = vmatprep.subr.mxu0 0.0
        %403 = vmatpush1.msra.mxu0 0.0
        %404 = vmatprep.subr.mxu0 0.0
        %405 = vmatpush1.msra.mxu0 0.0
        %406 = vmatprep.subr.mxu0 0.0
        %407 = vmatpush1.msra.mxu0 0.0
        %408 = vmatprep.subr.mxu0 0.0
        %409 = vmatpush1.msra.mxu0 0.0
        %410 = vmatprep.subr.mxu0 0.0
        %411 = vmatpush1.msra.mxu0 0.0
        %412 = vmatprep.subr.mxu0 0.0
        %413 = vmatpush1.msra.mxu0 0.0
        %414 = vmatprep.subr.mxu0 0.0
        %415 = vmatpush1.msra.mxu0 0.0
        %416 = vmatprep.subr.mxu0 0.0
        %417 = vmatpush1.msra.mxu0 0.0
        %418 = vmatprep.subr.mxu0 0.0
        %419 = vmatpush1.msra.mxu0 0.0
        %420 = vmatprep.mubr.f32.mxu0 0.0
        %421 = vmatmul.mubr.f32.gmra.mrb[0].mxu0 %v344
        %v422 = vpop.f32.mrb[0].mxu0
        %v423 = vadd.f32 %v340, %v422
        %v424 = vpop.f32.mrb[0].mxu0
        %v425 = vadd.f32 %v340, %v424
        %426 = vdwg.mxu0
        %427 = vmatprep.subr.mxu0 0.0
        %428 = vmatpush1.msra.mxu0 %v324
        %429 = vmatprep.subr.mxu0 0.0
        %430 = vmatpush1.msra.mxu0 %v327
        %431 = vmatprep.subr.mxu0 0.0
        %432 = vmatpush1.msra.mxu0 %v330
        %433 = vmatprep.subr.mxu0 0.0
        %434 = vmatpush1.msra.mxu0 %v333
        %435 = vmatprep.subr.mxu0 0.0
        %436 = vmatpush1.msra.mxu0 %v354
        %437 = vmatprep.subr.mxu0 0.0
        %438 = vmatpush1.msra.mxu0 0.0
        %439 = vmatprep.subr.mxu0 0.0
        %440 = vmatpush1.msra.mxu0 0.0
        %441 = vmatprep.subr.mxu0 0.0
        %442 = vmatpush1.msra.mxu0 0.0
        %443 = vmatprep.subr.mxu0 0.0
        %444 = vmatpush1.msra.mxu0 0.0
        %445 = vmatprep.subr.mxu0 0.0
        %446 = vmatpush1.msra.mxu0 0.0
        %447 = vmatprep.subr.mxu0 0.0
        %448 = vmatpush1.msra.mxu0 0.0
        %449 = vmatprep.subr.mxu0 0.0
        %450 = vmatpush1.msra.mxu0 0.0
        %451 = vmatprep.subr.mxu0 0.0
        %452 = vmatpush1.msra.mxu0 0.0
        %453 = vmatprep.subr.mxu0 0.0
        %454 = vmatpush1.msra.mxu0 0.0
        %455 = vmatprep.subr.mxu0 0.0
        %456 = vmatpush1.msra.mxu0 0.0
        %457 = vmatprep.subr.mxu0 0.0
        %458 = vmatpush1.msra.mxu0 0.0
        %459 = vmatprep.subr.mxu0 0.0
        %460 = vmatpush1.msra.mxu0 0.0
        %461 = vmatprep.subr.mxu0 0.0
        %462 = vmatpush1.msra.mxu0 0.0
        %463 = vmatprep.subr.mxu0 0.0
        %464 = vmatpush1.msra.mxu0 0.0
        %465 = vmatprep.subr.mxu0 0.0
        %466 = vmatpush1.msra.mxu0 0.0
        %467 = vmatprep.subr.mxu0 0.0
        %468 = vmatpush1.msra.mxu0 0.0
        %469 = vmatprep.subr.mxu0 0.0
        %470 = vmatpush1.msra.mxu0 0.0
        %471 = vmatprep.subr.mxu0 0.0
        %472 = vmatpush1.msra.mxu0 0.0
        %473 = vmatprep.subr.mxu0 0.0
        %474 = vmatpush1.msra.mxu0 0.0
        %475 = vmatprep.subr.mxu0 0.0
        %476 = vmatpush1.msra.mxu0 0.0
        %477 = vmatprep.subr.mxu0 0.0
        %478 = vmatpush1.msra.mxu0 0.0
        %479 = vmatprep.subr.mxu0 0.0
        %480 = vmatpush1.msra.mxu0 0.0
        %481 = vmatprep.subr.mxu0 0.0
        %482 = vmatpush1.msra.mxu0 0.0
        %483 = vmatprep.subr.mxu0 0.0
        %484 = vmatpush1.msra.mxu0 0.0
        %485 = vmatprep.subr.mxu0 0.0
        %486 = vmatpush1.msra.mxu0 0.0
        %487 = vmatprep.subr.mxu0 0.0
        %488 = vmatpush1.msra.mxu0 0.0
        %489 = vmatprep.subr.mxu0 0.0
        %490 = vmatpush1.msra.mxu0 0.0
        %491 = vmatprep.mubr.f32.mxu0 0.0
        %492 = vmatmul.mubr.f32.gmra.mrb[0].mxu0 %v344
        %v493 = vpop.f32.mrb[0].mxu0
        %v494 = vadd.f32 %v340, %v493
        %v495 = vpop.f32.mrb[0].mxu0
        %496 = vdwg.mxu0
        %v497 = vtanh.pop %v423
        %v498 = vtanh.pop %v425
        %v499 = vtanh.pop %v494
        %vm500 = vcmask 130048
        %501 = vst.msk [vmem:[%s186] sm:$0xff] %vm500, %v497
        %503 = vrot.lane.b32.xlu0 %v497, 126
        %v504 = vpop.permute.xlu0 %503
        %vm506 = vcmask 261248
        %507 = vst.msk [vmem:[%s186] sm:$0xff] %vm506, %v504
        %508 = vrot.lane.b32.xlu0 %v497, 124
        %v509 = vpop.permute.xlu0 %508
        %vm511 = vcmask 392448
        %512 = vst.msk [vmem:[%s186] sm:$0xff] %vm511, %v509
        %513 = vrot.lane.b32.xlu0 %v497, 122
        %v514 = vpop.permute.xlu0 %513
        %vm516 = vcmask 523648
        %517 = vst.msk [vmem:[%s186] sm:$0xff] %vm516, %v514
        %518 = vrot.lane.b32.xlu0 %v497, 120
        %v519 = vpop.permute.xlu0 %518
        %vm521 = vcmask 654848
        %522 = vst.msk [vmem:[%s186] sm:$0xff] %vm521, %v519
        %523 = vrot.lane.b32.xlu0 %v497, 118
        %v524 = vpop.permute.xlu0 %523
        %vm526 = vcmask 786048
        %527 = vst.msk [vmem:[%s186] sm:$0xff] %vm526, %v524
        %528 = vrot.lane.b32.xlu0 %v497, 116
        %v529 = vpop.permute.xlu0 %528
        %vm531 = vcmask 917248
        %532 = vst.msk [vmem:[%s186] sm:$0xff] %vm531, %v529
        %534 = vrot.lane.b32.xlu0 %v497, 114
        %v535 = vpop.permute.xlu0 %534
        %536 = vrot.lane.b32.xlu0 %v498, 114
        %v537 = vpop.permute.xlu0 %536
        %vm538 = vcmask 932864
        %v539 = vsel %vm538, %v535, %v537
        %vm541 = vcmask 1048448
        %542 = vst.msk [vmem:[%s186] sm:$0xff] %vm541, %v539
        %543 = vrot.lane.b32.xlu0 %v498, 112
        %v544 = vpop.permute.xlu0 %543
        %546 = vst.msk [vmem:[%s186 + $0x8] sm:$0xff] %vm500, %v544
        %547 = vrot.lane.b32.xlu0 %v498, 110
        %v548 = vpop.permute.xlu0 %547
        %550 = vst.msk [vmem:[%s186 + $0x8] sm:$0xff] %vm506, %v548
        %551 = vrot.lane.b32.xlu0 %v498, 108
        %v552 = vpop.permute.xlu0 %551
        %554 = vst.msk [vmem:[%s186 + $0x8] sm:$0xff] %vm511, %v552
        %555 = vrot.lane.b32.xlu0 %v498, 106
        %v556 = vpop.permute.xlu0 %555
        %558 = vst.msk [vmem:[%s186 + $0x8] sm:$0xff] %vm516, %v556
        %559 = vrot.lane.b32.xlu0 %v498, 104
        %v560 = vpop.permute.xlu0 %559
        %562 = vst.msk [vmem:[%s186 + $0x8] sm:$0xff] %vm521, %v560
        %563 = vrot.lane.b32.xlu0 %v498, 102
        %v564 = vpop.permute.xlu0 %563
        %566 = vst.msk [vmem:[%s186 + $0x8] sm:$0xff] %vm526, %v564
        %568 = vrot.lane.b32.xlu0 %v498, 100
        %v569 = vpop.permute.xlu0 %568
        %570 = vrot.lane.b32.xlu0 %v499, 100
        %v571 = vpop.permute.xlu0 %570
        %vm572 = vcmask 818176
        %v573 = vsel %vm572, %v569, %v571
        %575 = vst.msk [vmem:[%s186 + $0x8] sm:$0xff] %vm531, %v573
        %576 = vrot.lane.b32.xlu0 %v499, 98
        %v577 = vpop.permute.xlu0 %576
        %579 = vst.msk [vmem:[%s186 + $0x8] sm:$0xff] %vm541, %v577
        %s580 = sand.u32 %s96, 1
        %s581 = scalar_lea.sflag [#allocation5], %s580
        %s582 = sand.u32 %s96, 1
        %s583 = smul.addr %s582, 16
        %s584 = scalar_lea.vmem [#allocation6], %s583
        // Predicated region
        $region37: #{tpu_custom_call.1} parent=31 // pred_check
          %p585 = pneg %p106
        $region38: #{tpu_custom_call.1} parent=31 // pred_check_branch
          %587 = sbr.rel (%p585) target = $region40
        $region39: #{tpu_custom_call.1} parent=31 // pred_region
          %s589 = ssub.s32 256, 256
          %590 = vsyncadd %s581, %s589
          %s591 = smul.addr %s20, 2
          %s592 = smul.addr %s591, 128
          %s593 = scalar_lea.hbm %s3, %s592
          %s595 = sshll.u32 %s584, 4
          %s596 = int_to_ptr.vmem [resolvable:$true] %s595
          %598 = dma.vmem_to_hbm [thread:$0]  %s596, 256, %s593, %s581
        $region40: #{tpu_custom_call.1} parent=31 // pred_fallthru
          _
      $region32: #{tpu_custom_call.1} parent=5 // pred_fallthru
        _
      %p599 = scmp.le.s32.totalorder 2, %s15
      // Predicated region
      $region41: #{tpu_custom_call.1} parent=5 // pred_check
        %p600 = pneg %p599
      $region42: #{tpu_custom_call.1} parent=5 // pred_check_branch
        %602 = sbr.rel (%p600) target = $region44
      $region43: #{tpu_custom_call.1} parent=5 // pred_region
        %s603 = ssub.s32 %s15, 2
        // Predicated region
        $region45: #{tpu_custom_call.1} parent=43 // pred_check
          %p604 = pneg %p112
        $region46: #{tpu_custom_call.1} parent=43 // pred_check_branch
          %606 = sbr.rel (%p604) target = $region48
        $region47: #{tpu_custom_call.1} parent=43 // pred_region
          %s607 = sand.u32 %s97, 1
          %s608 = scalar_lea.sflag [#allocation5], %s607
          %s609 = sand.u32 %s97, 1
          %s610 = smul.addr %s609, 16
          %s611 = scalar_lea.vmem [#allocation6], %s610
          %612 = dma.done %s608, 256
        $region48: #{tpu_custom_call.1} parent=43 // pred_fallthru
          _
      $region44: #{tpu_custom_call.1} parent=5 // pred_fallthru
        _
    $region6: #{tpu_custom_call.1} parent=1 // loop_footer
      %s19 = sadd.s32 1, %s15
    $region7: #{tpu_custom_call.1} parent=1 // loop_footer_branch
      %14 = sbr.rel target = $region3
    $region8: #{tpu_custom_call.1} parent=1 // loop_exit
      _
    %613 = vsyncpa [#allocation4], 1
    %s614 = scalar_lea.sflag [#allocation4], 1
    %615 = vsyncpa %s614, 1
    %616 = vsyncpa [#allocation5], 1
    %s617 = scalar_lea.sflag [#allocation5], 1
    %618 = vsyncpa %s617, 1

</llo_original>
